<compile_context>
chip_gen: v5e
topology: v5e:2x2
jax: 0.10.0
libtpu: 0.0.40
codegen_flags: <defaults>
</compile_context>

<pallas_src>
import jax
import jax.numpy as jnp
from jax.experimental import pallas as pl
from jax.experimental.pallas import tpu as pltpu


def _round_up(x, m):
    return ((x + m - 1) // m) * m


def _num_tensorcores_per_chip():
    # v7x has 2 TensorCores per chip; v5e/v6e have 1.  Best-effort detection;
    # fall back to 1 (single-big-tile policy) for unknown backends / interpret.
    try:
        kind = jax.devices()[0].device_kind.lower()
        if "v7" in kind or "tpu7" in kind:
            return 2
    except Exception:
        pass
    return 1


def _ffpolicy_kernel(x_ref, w1_ref, b1_ref, wh_ref, bh_ref, slab_ref, value_ref):
    x = x_ref[...]                                   # [TB, D]
    TB = x.shape[0]
    H = w1_ref.shape[1]
    A = wh_ref.shape[1] - 1
    OUT_W = slab_ref.shape[1]

    # FF base: hidden = tanh(x @ W1 + b1).  bf16 MXU operands (no-op if the caller
    # already supplies bf16 activations), f32 accumulation, f32 tanh.
    h = jnp.tanh(
        jnp.dot(x.astype(jnp.bfloat16), w1_ref[...],
                preferred_element_type=jnp.float32) + b1_ref[...]
    )                                                # [TB, H] f32

    # Fused heads: [value | logits] = h @ [Wv | Wa] + [bv | ba]
    hv = jnp.dot(h.astype(jnp.bfloat16), wh_ref[...],
                 preferred_element_type=jnp.float32) + bh_ref[...]   # [TB, 1+A] f32
    value = hv[:, 0:1]                               # [TB, 1]
    logits = hv[:, 1:1 + A]                          # [TB, A]

    # Numerically stable, EXACT softmax (approx reciprocal made row sums drift).
    m = jnp.max(logits, axis=-1, keepdims=True)
    ex = jnp.exp(logits - m)
    s = jnp.sum(ex, axis=-1, keepdims=True)
    probs = ex / s                                   # [TB, A]

    # Deterministic sample: first-max argmax (matches torch.argmax tie-breaking).
    # (1, A) iota broadcast inside where() -> no [TB, A] constant materialized.
    col = jax.lax.broadcasted_iota(jnp.int32, (1, A), 1)
    action = jnp.min(jnp.where(logits >= m, col, A), axis=-1, keepdims=True)  # [TB,1]

    # ONE unmasked full-width store of a lane-dense bf16 slab:
    #   lanes [0, H)        -> hidden features x
    #   lane  H             -> action (bf16 exact for A <= 256)
    #   lanes [H+1, H+1+A)  -> softmax probs
    #   remaining lanes     -> zero padding
    pad = jnp.zeros((TB, OUT_W - (H + 1 + A)), jnp.float32)
    packed = jnp.concatenate([h, action.astype(jnp.float32), probs, pad], axis=1)
    slab_ref[...] = packed.astype(slab_ref.dtype)

    # Critic value kept as a tiny separate f32 output (precision matters downstream).
    value_ref[...] = value


def init_params(key, obs_dim, hidden_dim, num_actions):
    k1, k2, k3 = jax.random.split(key, 3)
    s1 = 1.0 / jnp.sqrt(jnp.float32(obs_dim))
    s2 = 1.0 / jnp.sqrt(jnp.float32(hidden_dim))
    wv = jax.random.normal(k2, (hidden_dim, 1), jnp.float32) * s2
    wa = jax.random.normal(k3, (hidden_dim, num_actions), jnp.float32) * s2
    return {
        # bf16 weights (halves DMA bytes, native MXU path); f32 biases.
        "w1": (jax.random.normal(k1, (obs_dim, hidden_dim), jnp.float32) * s1
               ).astype(jnp.bfloat16),
        "b1": jnp.zeros((1, hidden_dim), jnp.float32),
        # fused [value | actor] head: [H, 1+A]
        "w_heads": jnp.concatenate([wv, wa], axis=1).astype(jnp.bfloat16),
        "b_heads": jnp.zeros((1, 1 + num_actions), jnp.float32),
    }


def ffpolicy_get_action_value_and_probs(params, inputs, states, masks, masktry,
                                        deterministic=True):
    """Mirrors FFPolicy.get_action_value_and_probs: (value, action, probs, states, x)."""
    del masks, masktry  # unused by a feed-forward (non-recurrent) policy
    if not deterministic:
        # TODO(synk): stochastic Categorical sampling needs in-kernel PRNG.
        raise NotImplementedError("stochastic (deterministic=False) sampling not implemented")

    B, D = inputs.shape
    H = params["w1"].shape[1]
    A = params["w_heads"].shape[1] - 1

    OUT_W = max(128, _round_up(H + 1 + A, 128))      # lane-dense packed slab width

    # Batch tile: big tiles amortize ~0.35us per-grid-step overhead (this kernel is
    # step-overhead / HBM-bound, not MXU-bound).  On v7x split into >= 2 tiles so
    # the "parallel" batch axis shards across both TensorCores.
    TB_CAP = 4096
    ncores = _num_tensorcores_per_chip()
    if ncores >= 2 and B >= 16:
        TB = min(_round_up(pl.cdiv(B, ncores), 8), TB_CAP)
    else:
        TB = min(_round_up(B, 8), TB_CAP)
    grid = (pl.cdiv(B, TB),)

    in_bytes = jnp.dtype(inputs.dtype).itemsize
    weights_bytes = (D * H + H * (1 + A)) * 2 + (H + 1 + A) * 4
    cost = pl.CostEstimate(
        flops=2 * B * (D * H + H * (1 + A)),
        transcendentals=B * (H + A),
        bytes_accessed=B * D * in_bytes + weights_bytes + B * OUT_W * 2 + B * 4,
    )

    # Double-buffered per-tile VMEM estimate; raise scoped limit only if we ever
    # approach the v5e 16 MiB default (not the case at TB <= 4096).
    vmem_est = 2 * (TB * D * in_bytes + TB * OUT_W * 2 + TB * 4) + 4 * weights_bytes
    compiler_kwargs = dict(dimension_semantics=("parallel",))
    if vmem_est > 12 * 1024 * 1024:
        compiler_kwargs["vmem_limit_bytes"] = min(vmem_est + (4 << 20), 64 << 20)

    slab, value = pl.pallas_call(
        _ffpolicy_kernel,
        out_shape=(jax.ShapeDtypeStruct((B, OUT_W), jnp.bfloat16),
                   jax.ShapeDtypeStruct((B, 1), jnp.float32)),
        grid=grid,
        in_specs=[
            pl.BlockSpec((TB, D), lambda i: (i, 0)),        # batch-tiled inputs
            pl.BlockSpec((D, H), lambda i: (0, 0)),         # W1 (VMEM-resident)
            pl.BlockSpec((1, H), lambda i: (0, 0)),         # b1
            pl.BlockSpec((H, 1 + A), lambda i: (0, 0)),     # fused [value|actor] W
            pl.BlockSpec((1, 1 + A), lambda i: (0, 0)),     # fused head bias
        ],
        out_specs=(pl.BlockSpec((TB, OUT_W), lambda i: (i, 0)),
                   pl.BlockSpec((TB, 1), lambda i: (i, 0))),
        compiler_params=pltpu.CompilerParams(**compiler_kwargs),
        cost_estimate=cost,
    )(inputs, params["w1"], params["b1"], params["w_heads"], params["b_heads"])

    x = slab[:, :H]                                   # hidden features (bf16)
    action = slab[:, H:H + 1].astype(jnp.int32)       # [B, 1]
    probs = slab[:, H + 1:H + 1 + A]                  # [B, A] (bf16)

    # `states` passes through unchanged for a feed-forward policy.
    return value, action, probs, states, x


if __name__ == "__main__":
    key = jax.random.PRNGKey(0)
    k_in, k_par = jax.random.split(key)

    B, D, H, A = 8, 32, 32, 6
    inputs = jax.random.normal(k_in, (B, D), jnp.float32)
    states = jnp.zeros((B, H), jnp.float32)       # pass-through for FF policy
    masks = jnp.ones((B, 1), jnp.float32)
    masktry = jnp.ones((B, 1), jnp.float32)

    params = init_params(k_par, D, H, A)

    value, action, probs, states_out, x = ffpolicy_get_action_value_and_probs(
        params, inputs, states, masks, masktry, deterministic=True)
    jax.block_until_ready((value, action, probs, states_out, x))

    # Pure-JAX f32 reference (same bf16 weights, f32 math) for loose parity checks.
    w1f = params["w1"].astype(jnp.float32)
    whf = params["w_heads"].astype(jnp.float32)
    h_ref = jnp.tanh(inputs @ w1f + params["b1"])
    hv_ref = h_ref @ whf + params["b_heads"]
    v_ref = hv_ref[:, 0:1]
    p_ref = jax.nn.softmax(hv_ref[:, 1:1 + A], axis=-1)

    probs_f32 = probs.astype(jnp.float32)
    x_f32 = x.astype(jnp.float32)

    assert value.shape == (B, 1) and value.dtype == jnp.float32
    assert action.shape == (B, 1) and action.dtype == jnp.int32
    assert probs.shape == (B, A)
    assert x.shape == (B, H)
    assert states_out.shape == states.shape
    assert bool(jnp.all(jnp.isfinite(value)))
    # exact in-kernel softmax; only bf16 slab quantization remains
    assert bool(jnp.all(jnp.abs(jnp.sum(probs_f32, axis=-1) - 1.0) < 2e-2))
    # actions are valid indices and pick the (near-)max probability
    assert bool(jnp.all((action[:, 0] >= 0) & (action[:, 0] < A)))
    rows = jnp.arange(B)
    assert bool(jnp.all(probs_f32[rows, action[:, 0]]
                        >= jnp.max(probs_f32, axis=-1) - 1e-2))
    # loose parity vs f32 reference (bf16 MXU operands + bf16 output slab)
    assert bool(jnp.all(jnp.abs(value - v_ref) < 5e-2))
    assert bool(jnp.all(jnp.abs(probs_f32 - p_ref) < 5e-2))
    assert bool(jnp.all(jnp.abs(x_f32 - h_ref) < 5e-2))

    print("KERNEL_OK")
</pallas_src>

<mosaic_0001>
module attributes {stable_mosaic.version = 11 : i64} {
  func.func @_ffpolicy_kernel(%arg0: i32, %arg1: memref<8x32xf32, #tpu.memory_space<vmem>>, %arg2: memref<32x32xbf16, #tpu.memory_space<vmem>>, %arg3: memref<1x32xf32, #tpu.memory_space<vmem>>, %arg4: memref<32x7xbf16, #tpu.memory_space<vmem>>, %arg5: memref<1x7xf32, #tpu.memory_space<vmem>>, %arg6: memref<8x128xbf16, #tpu.memory_space<vmem>>, %arg7: memref<8x1xf32, #tpu.memory_space<vmem>>) attributes {dimension_semantics = [#tpu.dimension_semantics<parallel>], iteration_bounds = array<i64: 1>, scalar_prefetch = 0 : i64, scratch_operands = 0 : i64, tpu.core_type = #tpu.core_type<tc>, window_params = [{transform_indices = @transform_0, window_bounds = array<i64: 8, 32>}, {pipeline_mode = #tpu.pipeline_mode<synchronous>, transform_indices = @transform_1, window_bounds = array<i64: 32, 32>}, {pipeline_mode = #tpu.pipeline_mode<synchronous>, transform_indices = @transform_2, window_bounds = array<i64: 1, 32>}, {pipeline_mode = #tpu.pipeline_mode<synchronous>, transform_indices = @transform_3, window_bounds = array<i64: 32, 7>}, {pipeline_mode = #tpu.pipeline_mode<synchronous>, transform_indices = @transform_4, window_bounds = array<i64: 1, 7>}, {transform_indices = @transform_5, window_bounds = array<i64: 8, 128>}, {transform_indices = @transform_6, window_bounds = array<i64: 8, 1>}]} {
    %c0 = arith.constant 0 : index
    %c0_0 = arith.constant 0 : index
    %0 = vector.load %arg1[%c0, %c0_0] : memref<8x32xf32, #tpu.memory_space<vmem>>, vector<8x32xf32>
    %1 = arith.truncf %0 : vector<8x32xf32> to vector<8x32xbf16>
    %c0_1 = arith.constant 0 : index
    %c0_2 = arith.constant 0 : index
    %2 = vector.load %arg2[%c0_1, %c0_2] : memref<32x32xbf16, #tpu.memory_space<vmem>>, vector<32x32xbf16>
    %cst = arith.constant dense<0.000000e+00> : vector<8x32xf32>
    %3 = tpu.matmul %1, %2, %cst {dimension_numbers = #tpu.dot_dimension_numbers<[1], [0], [0], [1], [0, 0, 1, 1], [], []>} : vector<8x32xbf16>, vector<32x32xbf16>, vector<8x32xf32> -> vector<8x32xf32>
    %c0_3 = arith.constant 0 : index
    %c0_4 = arith.constant 0 : index
    %4 = vector.load %arg3[%c0_3, %c0_4] : memref<1x32xf32, #tpu.memory_space<vmem>>, vector<1x32xf32>
    %5 = vector.broadcast %4 : vector<1x32xf32> to vector<8x32xf32>
    %6 = arith.addf %3, %5 : vector<8x32xf32>
    %7 = math.tanh %6 : vector<8x32xf32>
    %8 = arith.truncf %7 : vector<8x32xf32> to vector<8x32xbf16>
    %c0_5 = arith.constant 0 : index
    %c0_6 = arith.constant 0 : index
    %9 = vector.load %arg4[%c0_5, %c0_6] : memref<32x7xbf16, #tpu.memory_space<vmem>>, vector<32x7xbf16>
    %cst_7 = arith.constant dense<0.000000e+00> : vector<8x7xf32>
    %10 = tpu.matmul %8, %9, %cst_7 {dimension_numbers = #tpu.dot_dimension_numbers<[1], [0], [0], [1], [0, 0, 1, 1], [], []>} : vector<8x32xbf16>, vector<32x7xbf16>, vector<8x7xf32> -> vector<8x7xf32>
    %c0_8 = arith.constant 0 : index
    %c0_9 = arith.constant 0 : index
    %11 = vector.load %arg5[%c0_8, %c0_9] : memref<1x7xf32, #tpu.memory_space<vmem>>, vector<1x7xf32>
    %12 = vector.broadcast %11 : vector<1x7xf32> to vector<8x7xf32>
    %13 = arith.addf %10, %12 : vector<8x7xf32>
    %14 = vector.extract_strided_slice %13 {offsets = [0, 0], sizes = [8, 1], strides = [1, 1]} : vector<8x7xf32> to vector<8x1xf32>
    %15 = vector.extract_strided_slice %13 {offsets = [0, 1], sizes = [8, 6], strides = [1, 1]} : vector<8x7xf32> to vector<8x6xf32>
    %cst_10 = arith.constant dense<0xFF800000> : vector<8xf32>
    %16 = vector.multi_reduction <maximumf>, %15, %cst_10 [1] : vector<8x6xf32> to vector<8xf32>
    %17 = vector.shape_cast %16 : vector<8xf32> to vector<8x1xf32>
    %18 = vector.broadcast %17 : vector<8x1xf32> to vector<8x6xf32>
    %19 = arith.subf %15, %18 : vector<8x6xf32>
    %20 = math.exp %19 : vector<8x6xf32>
    %cst_11 = arith.constant dense<0.000000e+00> : vector<8xf32>
    %21 = vector.multi_reduction <add>, %20, %cst_11 [1] : vector<8x6xf32> to vector<8xf32>
    %22 = vector.shape_cast %21 : vector<8xf32> to vector<8x1xf32>
    %23 = vector.broadcast %22 : vector<8x1xf32> to vector<8x6xf32>
    %24 = arith.divf %20, %23 : vector<8x6xf32>
    %25 = tpu.iota {dimensions = array<i32: 1>} : vector<1x6xi32>
    %26 = vector.broadcast %17 : vector<8x1xf32> to vector<8x6xf32>
    %27 = arith.cmpf oge, %15, %26 : vector<8x6xf32>
    %c6_i32 = arith.constant 6 : i32
    %28 = vector.shape_cast %25 : vector<1x6xi32> to vector<1x6xi32>
    %29 = vector.broadcast %28 : vector<1x6xi32> to vector<8x6xi32>
    %30 = vector.broadcast %c6_i32 : i32 to vector<8x6xi32>
    %31 = arith.select %27, %29, %30 : vector<8x6xi1>, vector<8x6xi32>
    %cst_12 = arith.constant dense<2147483647> : vector<8xi32>
    %32 = vector.multi_reduction <minsi>, %31, %cst_12 [1] : vector<8x6xi32> to vector<8xi32>
    %33 = vector.shape_cast %32 : vector<8xi32> to vector<8x1xi32>
    %cst_13 = arith.constant 0.000000e+00 : f32
    %34 = vector.broadcast %cst_13 : f32 to vector<8x89xf32>
    %35 = arith.sitofp %33 : vector<8x1xi32> to vector<8x1xf32>
    %36 = tpu.concatenate %7, %35, %24, %34 in 1 : vector<8x32xf32>, vector<8x1xf32>, vector<8x6xf32>, vector<8x89xf32> -> vector<8x128xf32>
    %37 = arith.truncf %36 : vector<8x128xf32> to vector<8x128xbf16>
    %c0_14 = arith.constant 0 : index
    %c0_15 = arith.constant 0 : index
    %38 = vector.load %arg6[%c0_14, %c0_15] : memref<8x128xbf16, #tpu.memory_space<vmem>>, vector<8x128xbf16>
    tpu.vector_store %arg6[%c0_14, %c0_15], %37 {strides = array<i32>} : memref<8x128xbf16, #tpu.memory_space<vmem>>, vector<8x128xbf16>,
    %c0_16 = arith.constant 0 : index
    %c0_17 = arith.constant 0 : index
    %39 = vector.load %arg7[%c0_16, %c0_17] : memref<8x1xf32, #tpu.memory_space<vmem>>, vector<8x1xf32>
    tpu.vector_store %arg7[%c0_16, %c0_17], %14 {strides = array<i32>} : memref<8x1xf32, #tpu.memory_space<vmem>>, vector<8x1xf32>,
    return
  }
  func.func @transform_0(%arg0: i32) -> (i32, i32) {
    %c0_i32 = arith.constant 0 : i32
    %c0_i32_0 = arith.constant 0 : i32
    return %arg0, %c0_i32 : i32, i32
  }
  func.func @transform_1(%arg0: i32) -> (i32, i32) {
    %c0_i32 = arith.constant 0 : i32
    %c0_i32_0 = arith.constant 0 : i32
    %c0_i32_1 = arith.constant 0 : i32
    return %c0_i32, %c0_i32_0 : i32, i32
  }
  func.func @transform_2(%arg0: i32) -> (i32, i32) {
    %c0_i32 = arith.constant 0 : i32
    %c0_i32_0 = arith.constant 0 : i32
    %c0_i32_1 = arith.constant 0 : i32
    return %c0_i32, %c0_i32_0 : i32, i32
  }
  func.func @transform_3(%arg0: i32) -> (i32, i32) {
    %c0_i32 = arith.constant 0 : i32
    %c0_i32_0 = arith.constant 0 : i32
    %c0_i32_1 = arith.constant 0 : i32
    return %c0_i32, %c0_i32_0 : i32, i32
  }
  func.func @transform_4(%arg0: i32) -> (i32, i32) {
    %c0_i32 = arith.constant 0 : i32
    %c0_i32_0 = arith.constant 0 : i32
    %c0_i32_1 = arith.constant 0 : i32
    return %c0_i32, %c0_i32_0 : i32, i32
  }
  func.func @transform_5(%arg0: i32) -> (i32, i32) {
    %c0_i32 = arith.constant 0 : i32
    %c0_i32_0 = arith.constant 0 : i32
    return %arg0, %c0_i32 : i32, i32
  }
  func.func @transform_6(%arg0: i32) -> (i32, i32) {
    %c0_i32 = arith.constant 0 : i32
    %c0_i32_0 = arith.constant 0 : i32
    return %arg0, %c0_i32 : i32, i32
  }
}

</mosaic_0001>

<llo_original>
// kernel: tpu_custom_call.1
$region0: #{tpu_custom_call.1}
  #allocation0 [shape = 'u32[]', space=smem, size = 0x4, offset = 0x4, fixed_abs, tag = 'smem constant byte address 0x4 - core index']
  #allocation1 [shape = 'u32[72,128]{1,0:T(1,128)}', space=vmem, size = 0x9000, scoped, tag = 'internal scratch']
  %s0 = inlined_call_operand.hbm [shape: f32[8,32], index: 0, kind: input, shape index: {}]
  %s1 = inlined_call_operand.vmem [shape: bf16[32,32], index: 1, kind: input, shape index: {}]
  %s2 = inlined_call_operand.vmem [shape: f32[1,32], index: 2, kind: input, shape index: {}]
  %s3 = inlined_call_operand.vmem [shape: bf16[32,7], index: 3, kind: input, shape index: {}]
  %s4 = inlined_call_operand.vmem [shape: f32[1,7], index: 4, kind: input, shape index: {}]
  %s5 = inlined_call_operand.hbm [shape: bf16[8,128], index: 5, kind: output, shape index: {0}]
  %s6 = inlined_call_operand.vmem [shape: f32[8,1], index: 6, kind: output, shape index: {1}]
  %7 = xla_tuple %s5, %s6
  %s8 = sld [smem:[#allocation0]]
  $region42: #{tpu_custom_call.1} parent=0
    _
  %s10 = ssub.s32 1, %s8
  %s11 = scalar_select 0, %s10, %s8
  $region1: #{tpu_custom_call.1} parent=0
    #allocation2 [shape = 'u8[4096]{0}', space=vmem, size = 0x1000, scoped, tag = 'input window, operand 0, single buffered']
    #allocation3 [shape = 's32[1]{0}', space=sflag, size = 0x4, scoped, tag = 'scoped memory for tpu_custom_call.1']
    #allocation4 [shape = 's32[1]{0}', space=sflag, size = 0x4, scoped, tag = 'scoped memory for tpu_custom_call.1']
    #allocation5 [shape = 'u8[2048]{0}', space=vmem, size = 0x800, scoped, tag = 'output window, operand 0, single buffered']
    %12 = vsyncpa [#allocation3], 0
    %13 = vsyncpa [#allocation4], 0
    // Predicated region
    $region2: #{tpu_custom_call.1} parent=1 // pred_check
      _
    $region3: #{tpu_custom_call.1} parent=1 // pred_check_branch
      %15 = sbr.rel (0) target = $region5
    $region4: #{tpu_custom_call.1} parent=1 // pred_region
      %17 = vsyncadd [#allocation3], 0
      %s19 = sshll.u32 %s0, 4
      %s20 = int_to_ptr.hbm [resolvable:$true] %s19
      %s21 = sshll.u32 [#allocation2], 4
      %s22 = int_to_ptr.vmem [resolvable:$true] %s21
      %24 = dma.hbm_to_vmem [thread:$0]  %s20, 128, %s22, [#allocation3]
    $region5: #{tpu_custom_call.1} parent=1 // pred_fallthru
      _
    // Predicated region
    $region6: #{tpu_custom_call.1} parent=1 // pred_check
      _
    $region7: #{tpu_custom_call.1} parent=1 // pred_check_branch
      %26 = sbr.rel (0) target = $region9
    $region8: #{tpu_custom_call.1} parent=1 // pred_region
      _
    $region9: #{tpu_custom_call.1} parent=1 // pred_fallthru
      _
    // Predicated region
    $region10: #{tpu_custom_call.1} parent=1 // pred_check
      _
    $region11: #{tpu_custom_call.1} parent=1 // pred_check_branch
      %28 = sbr.rel (0) target = $region13
    $region12: #{tpu_custom_call.1} parent=1 // pred_region
      _
    $region13: #{tpu_custom_call.1} parent=1 // pred_fallthru
      _
    // Predicated region
    $region14: #{tpu_custom_call.1} parent=1 // pred_check
      _
    $region15: #{tpu_custom_call.1} parent=1 // pred_check_branch
      %30 = sbr.rel (0) target = $region17
    $region16: #{tpu_custom_call.1} parent=1 // pred_region
      _
    $region17: #{tpu_custom_call.1} parent=1 // pred_fallthru
      _
    // Predicated region
    $region18: #{tpu_custom_call.1} parent=1 // pred_check
      _
    $region19: #{tpu_custom_call.1} parent=1 // pred_check_branch
      %32 = sbr.rel (0) target = $region21
    $region20: #{tpu_custom_call.1} parent=1 // pred_region
      _
    $region21: #{tpu_custom_call.1} parent=1 // pred_fallthru
      _
    // Predicated region
    $region22: #{tpu_custom_call.1} parent=1 // pred_check
      _
    $region23: #{tpu_custom_call.1} parent=1 // pred_check_branch
      %34 = sbr.rel (0) target = $region25
    $region24: #{tpu_custom_call.1} parent=1 // pred_region
      %36 = dma.done [#allocation3], 128
    $region25: #{tpu_custom_call.1} parent=1 // pred_fallthru
      _
    %v38 = vld [vmem:[#allocation2] sm:$0xff]
    %v39 = vpack.c.bf16 %v38, %v38
    %v40 = vld [vmem:[%s1] sm:$0xf]
    %v41 = vld [vmem:[%s1 + $0x4] sm:$0xf]
    %v42 = vld [vmem:[%s1 + $0x8] sm:$0xf]
    %v43 = vld [vmem:[%s1 + $0xc] sm:$0xf]
    %v44 = vld [vmem:[%s2] sm:$0x1]
    %v46 = vperm.slane %v44, 0
    %v52 = vunpack.c.l.b16 %v40
    %v53 = vunpack.c.l.b16 %v41
    %v54 = vunpack.c.l.b16 %v42
    %v55 = vunpack.c.l.b16 %v43
    %v56 = vpack.c.b16 %v53, %v52
    %v57 = vpack.c.b16 %v55, %v54
    %vm60 = vcmask 261120
    %v62 = vsel %vm60, %v39, 0
    %64 = vmatpush.bf16.msra.mxu0 0
    %65 = vmatpush.bf16.msra.mxu0 0
    %66 = vmatpush.bf16.msra.mxu0 0
    %67 = vmatpush.bf16.msra.mxu0 0
    %68 = vmatpush.bf16.msra.mxu0 0
    %69 = vmatpush.bf16.msra.mxu0 0
    %70 = vmatpush.bf16.msra.mxu0 %v57
    %71 = vmatpush.bf16.msra.mxu0 %v56
    %72 = vmatmul.bf16.gmra.mxu0 %v62
    %v73 = vpop.f32.mrf.mxu0
    %v74 = vadd.f32 %v46, %v73
    %v75 = vpop.f32.mrf.mxu0
    %76 = vdwg.mxu0
    %v77 = vtanh.pop %v74
    %v78 = vpack.c.bf16 %v77, %v77
    %v79 = vld [vmem:[%s3] sm:$0xf]
    %v80 = vld [vmem:[%s3 + $0x4] sm:$0xf]
    %v81 = vld [vmem:[%s3 + $0x8] sm:$0xf]
    %v82 = vld [vmem:[%s3 + $0xc] sm:$0xf]
    %v83 = vld [vmem:[%s4] sm:$0x1]
    %v85 = vperm.slane %v83, 0
    %v91 = vunpack.c.l.b16 %v79
    %v92 = vunpack.c.l.b16 %v80
    %v93 = vunpack.c.l.b16 %v81
    %v94 = vunpack.c.l.b16 %v82
    %v95 = vpack.c.b16 %v92, %v91
    %v96 = vpack.c.b16 %v94, %v93
    %v100 = vsel %vm60, %v78, 0
    %102 = vmatpush.bf16.msra.mxu0 0
    %103 = vmatpush.bf16.msra.mxu0 0
    %104 = vmatpush.bf16.msra.mxu0 0
    %105 = vmatpush.bf16.msra.mxu0 0
    %106 = vmatpush.bf16.msra.mxu0 0
    %107 = vmatpush.bf16.msra.mxu0 0
    %108 = vmatpush.bf16.msra.mxu0 %v96
    %109 = vmatpush.bf16.msra.mxu0 %v95
    %110 = vmatmul.bf16.gmra.mxu0 %v100
    %v111 = vpop.f32.mrf.mxu0
    %v112 = vadd.f32 %v85, %v111
    %v113 = vpop.f32.mrf.mxu0
    %114 = vdwg.mxu0
    %vm115 = vcmask 56328
    %v116 = vsel %vm115, %v112, -inf
    %117 = vmax.xlane.f32.xlu0 %v116
    %v118 = vpop.xlane.xlu0 %117
    %v119 = vsub.f32 %v112, %v118
    %v120 = vmul.f32 %v119, 1.442695
    %v121 = vpow.pop %v120
    %123 = vrot.lane.b32.xlu0 %v121, 127
    %v124 = vpop.permute.xlu0 %123
    %vm126 = vcmask 48128
    %v127 = vsel %vm126, %v124, 0.0
    %128 = vadd.xlane.f32.xlu0 %v127
    %v129 = vpop.xlane.xlu0 %128
    %v130 = vrcp.pop %v129
    %v131 = vmul.f32 %v129, %v130
    %v132 = vsub.f32 1.0, %v131
    %v133 = vmul.f32 %v130, %v132
    %v134 = vadd.f32 %v130, %v133
    %vm135 = vweird.f32 %v129
    %vm136 = vweird.f32 %v130
    %vm137 = vmor %vm135, %vm136
    %v138 = vsel %vm137, %v130, %v134
    %v139 = vand.u32 2147483647, %v129
    %vm140 = vcmp.eq.f32.partialorder %v139, 8.507059e+37
    %v141 = vand.u32 %v129, 2147483648
    %v142 = vor.u32 1.1754944e-38, %v141
    %v143 = vsel %vm140, %v142, %v138
    %v144 = vmul.f32 %v121, %v143
    %v145 = vlaneseq
    %v146 = vand.u32 %v145, 127
    %vm147 = vcmp.ge.f32.partialorder %v112, %v118
    %148 = vrot.lane.b32.xlu0 %v146, 1
    %v149 = vpop.permute.xlu0 %148
    %v150 = vsel %vm147, %v149, 6
    %v151 = vsel %vm115, %v150, 2147483647
    %v152 = vand.u32 %v151, 65535
    %v153 = vshra.s32 %v151, 16
    %v154 = vcvt.s32.f32 %v152
    %v155 = vcvt.s32.f32 %v153
    %156 = vmin.xlane.f32.xlu0 %v155
    %v157 = vpop.xlane.xlu0 %156
    %vm158 = vcmp.eq.f32.partialorder %v155, %v157
    %v159 = vsel %vm158, %v154, inf
    %160 = vmin.xlane.f32.xlu0 %v159
    %v161 = vpop.xlane.xlu0 %160
    %v162 = vcvt.f32.s32 %v161
    %v163 = vcvt.f32.s32 %v157
    %v164 = vshll.u32 %v163, 16
    %v165 = vadd.s32 %v164, %v162
    %v166 = vcvt.s32.f32 %v165
    %168 = vrot.lane.b32.xlu0 %v144, 32
    %v169 = vpop.permute.xlu0 %168
    %v171 = vsel %vm60, %v77, %v166
    %vm172 = vcmask 269312
    %v173 = vsel %vm172, %v171, %v169
    %vm174 = vcmask 318464
    %v175 = vsel %vm174, %v173, 0.0
    %v176 = vpack.c.bf16 %v175, %v175
    %177 = vst [vmem:[#allocation5] sm:$0xf] %v176
    %vm178 = vcmask 7168
    %179 = vst.msk [vmem:[%s6] sm:$0xff] %vm178, %v112
    // Predicated region
    $region26: #{tpu_custom_call.1} parent=1 // pred_check
      _
    $region27: #{tpu_custom_call.1} parent=1 // pred_check_branch
      %181 = sbr.rel (0) target = $region29
    $region28: #{tpu_custom_call.1} parent=1 // pred_region
      %183 = vsyncadd [#allocation4], 0
      %s185 = sshll.u32 [#allocation5], 4
      %s186 = int_to_ptr.vmem [resolvable:$true] %s185
      %s187 = sshll.u32 %s5, 4
      %s188 = int_to_ptr.hbm [resolvable:$true] %s187
      %190 = dma.vmem_to_hbm [thread:$0]  %s186, 64, %s188, [#allocation4]
    $region29: #{tpu_custom_call.1} parent=1 // pred_fallthru
      _
    // Predicated region
    $region30: #{tpu_custom_call.1} parent=1 // pred_check
      _
    $region31: #{tpu_custom_call.1} parent=1 // pred_check_branch
      %192 = sbr.rel (0) target = $region33
    $region32: #{tpu_custom_call.1} parent=1 // pred_region
      _
    $region33: #{tpu_custom_call.1} parent=1 // pred_fallthru
      _
    // Predicated region
    $region34: #{tpu_custom_call.1} parent=1 // pred_check
      _
    $region35: #{tpu_custom_call.1} parent=1 // pred_check_branch
      %194 = sbr.rel (0) target = $region37
    $region36: #{tpu_custom_call.1} parent=1 // pred_region
      %196 = dma.done [#allocation4], 64
    $region37: #{tpu_custom_call.1} parent=1 // pred_fallthru
      _
    // Predicated region
    $region38: #{tpu_custom_call.1} parent=1 // pred_check
      _
    $region39: #{tpu_custom_call.1} parent=1 // pred_check_branch
      %198 = sbr.rel (0) target = $region41
    $region40: #{tpu_custom_call.1} parent=1 // pred_region
      _
    $region41: #{tpu_custom_call.1} parent=1 // pred_fallthru
      _
    %199 = vsyncpa [#allocation3], 1
    %200 = vsyncpa [#allocation4], 1

</llo_original>
